<compile_context>
chip_gen: v7x
topology: tpu7x:2x2x1
jax: 0.10.0
libtpu: 0.0.40
codegen_flags: <defaults>
</compile_context>

<pallas_src>
import functools

import jax
import jax.numpy as jnp
from jax.experimental import pallas as pl
from jax.experimental.pallas import tpu as pltpu


def _channel_attention_kernel(x_ref, w1_ref, w2t_ref, o_ref,
                              sum_acc, max_acc, *, hw, thw):
    """grid = (batch_tiles, spatial_tiles); spatial axis is the reduction."""
    k = pl.program_id(1)
    nk = pl.num_programs(1)

    @pl.when(k == 0)
    def _init():
        sum_acc[...] = jnp.zeros(sum_acc.shape, dtype=sum_acc.dtype)
        max_acc[...] = jnp.full(max_acc.shape, -jnp.inf, dtype=max_acc.dtype)

    x = x_ref[...].astype(jnp.float32)                   # (BT, C, THW)

    if hw % thw != 0:
        # Last spatial tile is partial: mask padded lanes explicitly.
        lane = jax.lax.broadcasted_iota(jnp.int32, (1, 1, thw), 2)
        valid = (k * thw + lane) < hw
        x_for_sum = jnp.where(valid, x, 0.0)
        x_for_max = jnp.where(valid, x, -jnp.inf)
    else:
        x_for_sum = x
        x_for_max = x

    # Per-chunk cross-lane (XLU) reduce into narrow (BT, C) accumulators.
    # Mem-bound kernel: the XLU reduce is free filler under the x DMA, and
    # narrow accumulators free VMEM for larger spatial tiles.
    sum_acc[...] = sum_acc[...] + jnp.sum(x_for_sum, axis=-1)
    max_acc[...] = jnp.maximum(max_acc[...], jnp.max(x_for_max, axis=-1))

    @pl.when(k == nk - 1)
    def _finalize():
        avg = sum_acc[...] * (1.0 / hw)                          # (BT, C)
        mx = max_acc[...]                                        # (BT, C)

        # Fused shared MLP over both pooled branches: one dot per layer.
        p = jnp.concatenate([avg, mx], axis=0)                   # (2*BT, C)
        w1 = w1_ref[...]                                         # (hidden, C)
        w2t = w2t_ref[...]                                       # (hidden, C)
        h = jax.lax.dot_general(
            p, w1, (((1,), (1,)), ((), ())),
            preferred_element_type=jnp.float32)                  # (2*BT, hidden)
        h = jnp.maximum(h, 0.0)                                  # ReLU
        y = jnp.dot(h, w2t, preferred_element_type=jnp.float32)  # (2*BT, C)

        bt = avg.shape[0]
        o_ref[...] = jax.nn.sigmoid(y[:bt] + y[bt:]).astype(o_ref.dtype)


def _pick_spatial_tile(bt, c, hw, x_itemsize, vmem_budget_bytes,
                       max_lanes_override=None):
    # Per lane of the spatial tile we hold only the 2 double-buffered x blocks
    # (accumulators are now narrow (BT, C) and negligible).
    bytes_per_lane = 2 * bt * c * x_itemsize
    max_lanes = max(128, (vmem_budget_bytes // bytes_per_lane) // 128 * 128)
    if max_lanes_override is not None:
        max_lanes = min(max_lanes, max(128, (max_lanes_override // 128) * 128))
    # Full-extent blocks are always legal; otherwise use a multiple of 128.
    return hw if hw <= max_lanes else max_lanes


def channel_attention(x, w1, w2, *, batch_tile=None, max_thw_lanes=None,
                      vmem_budget_bytes=20 << 20):
    """x: (B, C, H, W); w1: (hidden, C); w2: (C, hidden). Returns (B, C, 1, 1)."""
    B, C, H, W = x.shape
    hidden = w1.shape[0]
    HW = H * W

    x_flat = x.reshape(B, C, HW)
    w2t = jnp.transpose(w2)                      # (hidden, C): lane-dense weight

    # Batch tile must equal B or be a multiple of 8 (output-block constraint).
    BT = batch_tile if batch_tile is not None else (B if B <= 8 else 8)
    THW = _pick_spatial_tile(BT, C, HW, x_flat.dtype.itemsize,
                             vmem_budget_bytes, max_thw_lanes)

    nb = pl.cdiv(B, BT)
    nk = pl.cdiv(HW, THW)

    kernel = functools.partial(_channel_attention_kernel, hw=HW, thw=THW)

    out = pl.pallas_call(
        kernel,
        out_shape=jax.ShapeDtypeStruct((B, C), jnp.float32),
        grid_spec=pltpu.PrefetchScalarGridSpec(
            num_scalar_prefetch=0,
            grid=(nb, nk),                       # reduction (HW) axis last
            in_specs=[
                pl.BlockSpec((BT, C, THW), lambda b, k: (b, 0, k)),
                pl.BlockSpec((hidden, C), lambda b, k: (0, 0)),
                pl.BlockSpec((hidden, C), lambda b, k: (0, 0)),
            ],
            out_specs=pl.BlockSpec((BT, C), lambda b, k: (b, 0)),
            scratch_shapes=[
                pltpu.VMEM((BT, C), jnp.float32),   # running sum  (narrow)
                pltpu.VMEM((BT, C), jnp.float32),   # running max  (narrow)
            ],
        ),
        compiler_params=pltpu.CompilerParams(
            dimension_semantics=("parallel", "arbitrary"),
            vmem_limit_bytes=32 << 20,
        ),
    )(x_flat, w1, w2t)

    return out.reshape(B, C, 1, 1)


def channel_attention_ref(x, w1, w2):
    """Pure-JAX reference matching the PyTorch module semantics."""
    avg = jnp.mean(x, axis=(2, 3))               # (B, C)
    mx = jnp.max(x, axis=(2, 3))                 # (B, C)

    def mlp(p):
        h = jnp.maximum(p @ w1.T, 0.0)
        return h @ w2.T

    out = jax.nn.sigmoid(mlp(avg) + mlp(mx))
    return out.reshape(x.shape[0], x.shape[1], 1, 1)


if __name__ == "__main__":
    key = jax.random.PRNGKey(0)
    kx, k1, k2, kx2 = jax.random.split(key, 4)

    B, C, H, W = 2, 64, 16, 16
    ratio = 16
    hidden = C // ratio  # 4

    x = jax.random.normal(kx, (B, C, H, W), dtype=jnp.float32)
    # nn.Conv2d(C, C//ratio, 1, bias=False) and nn.Conv2d(C//ratio, C, 1, bias=False)
    # with the trailing 1x1 spatial dims squeezed away.
    w1 = jax.random.normal(k1, (hidden, C), dtype=jnp.float32) * (1.0 / jnp.sqrt(C))
    w2 = jax.random.normal(k2, (C, hidden), dtype=jnp.float32) * (1.0 / jnp.sqrt(hidden))

    out = jax.block_until_ready(channel_attention(x, w1, w2))
    ref = channel_attention_ref(x, w1, w2)
    assert out.shape == (B, C, 1, 1)
    assert jnp.allclose(out, ref, rtol=1e-4, atol=1e-5), \
        float(jnp.max(jnp.abs(out - ref)))

    # Second check: ragged spatial size with a forced small spatial tile so the
    # multi-chunk reduction + partial-tile masking path is exercised.
    H2, W2 = 18, 10                              # HW = 180, THW = 128 -> 2 chunks
    x2 = jax.random.normal(kx2, (B, C, H2, W2), dtype=jnp.float32)
    out2 = jax.block_until_ready(channel_attention(x2, w1, w2, max_thw_lanes=128))
    ref2 = channel_attention_ref(x2, w1, w2)
    assert jnp.allclose(out2, ref2, rtol=1e-4, atol=1e-5), \
        float(jnp.max(jnp.abs(out2 - ref2)))

    # TODO(synk): optional bf16 x at the wrapper boundary (f32 accumulation kept
    # in-kernel) would halve HBM bytes; left off to preserve f32 reference parity.

    print("KERNEL_OK")
</pallas_src>

<mosaic_0001>
module attributes {stable_mosaic.version = 11 : i64} {
  func.func @_channel_attention_kernel(%arg0: i32, %arg1: i32, %arg2: memref<2x64x256xf32, #tpu.memory_space<vmem>>, %arg3: memref<4x64xf32, #tpu.memory_space<vmem>>, %arg4: memref<4x64xf32, #tpu.memory_space<vmem>>, %arg5: memref<2x64xf32, #tpu.memory_space<vmem>>, %arg6: memref<2x64xf32, #tpu.memory_space<vmem>>, %arg7: memref<2x64xf32, #tpu.memory_space<vmem>>) attributes {dimension_semantics = [#tpu.dimension_semantics<parallel>, #tpu.dimension_semantics<arbitrary>], iteration_bounds = array<i64: 1, 1>, scalar_prefetch = 0 : i64, scratch_operands = 2 : i64, tpu.core_type = #tpu.core_type<tc>, window_params = [{transform_indices = @transform_0, window_bounds = array<i64: 2, 64, 256>}, {pipeline_mode = #tpu.pipeline_mode<synchronous>, transform_indices = @transform_1, window_bounds = array<i64: 4, 64>}, {pipeline_mode = #tpu.pipeline_mode<synchronous>, transform_indices = @transform_2, window_bounds = array<i64: 4, 64>}, {transform_indices = @transform_3, window_bounds = array<i64: 2, 64>}]} {
    %c0_i32 = arith.constant 0 : i32
    %0 = arith.cmpi eq, %arg1, %c0_i32 : i32
    %1 = arith.extui %0 : i1 to i32
    %c0_i32_0 = arith.constant 0 : i32
    %2 = arith.cmpi ne, %1, %c0_i32_0 : i32
    scf.if %2 {
      %cst_14 = arith.constant 0.000000e+00 : f32
      %15 = vector.broadcast %cst_14 : f32 to vector<2x64xf32>
      %c0_15 = arith.constant 0 : index
      %c0_16 = arith.constant 0 : index
      %16 = vector.load %arg6[%c0_15, %c0_16] : memref<2x64xf32, #tpu.memory_space<vmem>>, vector<2x64xf32>
      tpu.vector_store %arg6[%c0_15, %c0_16], %15 {strides = array<i32>} : memref<2x64xf32, #tpu.memory_space<vmem>>, vector<2x64xf32>,
      %cst_17 = arith.constant 0xFF800000 : f32
      %17 = vector.broadcast %cst_17 : f32 to vector<2x64xf32>
      %c0_18 = arith.constant 0 : index
      %c0_19 = arith.constant 0 : index
      %18 = vector.load %arg7[%c0_18, %c0_19] : memref<2x64xf32, #tpu.memory_space<vmem>>, vector<2x64xf32>
      tpu.vector_store %arg7[%c0_18, %c0_19], %17 {strides = array<i32>} : memref<2x64xf32, #tpu.memory_space<vmem>>, vector<2x64xf32>,
    } else {
    }
    %c0 = arith.constant 0 : index
    %c0_1 = arith.constant 0 : index
    %c0_2 = arith.constant 0 : index
    %3 = vector.load %arg2[%c0, %c0_1, %c0_2] : memref<2x64x256xf32, #tpu.memory_space<vmem>>, vector<2x64x256xf32>
    %c0_3 = arith.constant 0 : index
    %c0_4 = arith.constant 0 : index
    %4 = vector.load %arg6[%c0_3, %c0_4] : memref<2x64xf32, #tpu.memory_space<vmem>>, vector<2x64xf32>
    %cst = arith.constant dense<0.000000e+00> : vector<2x64xf32>
    %5 = vector.multi_reduction <add>, %3, %cst [2] : vector<2x64x256xf32> to vector<2x64xf32>
    %6 = arith.addf %4, %5 : vector<2x64xf32>
    %c0_5 = arith.constant 0 : index
    %c0_6 = arith.constant 0 : index
    %7 = vector.load %arg6[%c0_5, %c0_6] : memref<2x64xf32, #tpu.memory_space<vmem>>, vector<2x64xf32>
    tpu.vector_store %arg6[%c0_5, %c0_6], %6 {strides = array<i32>} : memref<2x64xf32, #tpu.memory_space<vmem>>, vector<2x64xf32>,
    %c0_7 = arith.constant 0 : index
    %c0_8 = arith.constant 0 : index
    %8 = vector.load %arg7[%c0_7, %c0_8] : memref<2x64xf32, #tpu.memory_space<vmem>>, vector<2x64xf32>
    %cst_9 = arith.constant dense<0xFF800000> : vector<2x64xf32>
    %9 = vector.multi_reduction <maximumf>, %3, %cst_9 [2] : vector<2x64x256xf32> to vector<2x64xf32>
    %10 = arith.maximumf %8, %9 : vector<2x64xf32>
    %c0_10 = arith.constant 0 : index
    %c0_11 = arith.constant 0 : index
    %11 = vector.load %arg7[%c0_10, %c0_11] : memref<2x64xf32, #tpu.memory_space<vmem>>, vector<2x64xf32>
    tpu.vector_store %arg7[%c0_10, %c0_11], %10 {strides = array<i32>} : memref<2x64xf32, #tpu.memory_space<vmem>>, vector<2x64xf32>,
    %c0_i32_12 = arith.constant 0 : i32
    %12 = arith.cmpi eq, %arg1, %c0_i32_12 : i32
    %13 = arith.extui %12 : i1 to i32
    %c0_i32_13 = arith.constant 0 : i32
    %14 = arith.cmpi ne, %13, %c0_i32_13 : i32
    scf.if %14 {
      %c0_14 = arith.constant 0 : index
      %c0_15 = arith.constant 0 : index
      %15 = vector.load %arg6[%c0_14, %c0_15] : memref<2x64xf32, #tpu.memory_space<vmem>>, vector<2x64xf32>
      %cst_16 = arith.constant 3.906250e-03 : f32
      %16 = vector.broadcast %cst_16 : f32 to vector<2x64xf32>
      %17 = arith.mulf %15, %16 : vector<2x64xf32>
      %c0_17 = arith.constant 0 : index
      %c0_18 = arith.constant 0 : index
      %18 = vector.load %arg7[%c0_17, %c0_18] : memref<2x64xf32, #tpu.memory_space<vmem>>, vector<2x64xf32>
      %19 = tpu.concatenate %17, %18 in 0 : vector<2x64xf32>, vector<2x64xf32> -> vector<4x64xf32>
      %c0_19 = arith.constant 0 : index
      %c0_20 = arith.constant 0 : index
      %20 = vector.load %arg3[%c0_19, %c0_20] : memref<4x64xf32, #tpu.memory_space<vmem>>, vector<4x64xf32>
      %c0_21 = arith.constant 0 : index
      %c0_22 = arith.constant 0 : index
      %21 = vector.load %arg4[%c0_21, %c0_22] : memref<4x64xf32, #tpu.memory_space<vmem>>, vector<4x64xf32>
      %cst_23 = arith.constant dense<0.000000e+00> : vector<4x4xf32>
      %22 = tpu.matmul %19, %20, %cst_23 {dimension_numbers = #tpu.dot_dimension_numbers<[1], [1], [0], [0], [0, 0, 1, 0], [], []>} : vector<4x64xf32>, vector<4x64xf32>, vector<4x4xf32> -> vector<4x4xf32>
      %cst_24 = arith.constant 0.000000e+00 : f32
      %23 = vector.broadcast %cst_24 : f32 to vector<4x4xf32>
      %24 = arith.maximumf %22, %23 : vector<4x4xf32>
      %cst_25 = arith.constant dense<0.000000e+00> : vector<4x64xf32>
      %25 = tpu.matmul %24, %21, %cst_25 {dimension_numbers = #tpu.dot_dimension_numbers<[1], [0], [0], [1], [0, 0, 1, 1], [], []>} : vector<4x4xf32>, vector<4x64xf32>, vector<4x64xf32> -> vector<4x64xf32>
      %26 = vector.extract_strided_slice %25 {offsets = [0, 0], sizes = [2, 64], strides = [1, 1]} : vector<4x64xf32> to vector<2x64xf32>
      %27 = vector.extract_strided_slice %25 {offsets = [2, 0], sizes = [2, 64], strides = [1, 1]} : vector<4x64xf32> to vector<2x64xf32>
      %28 = arith.addf %26, %27 : vector<2x64xf32>
      %29 = arith.negf %28 : vector<2x64xf32>
      %30 = math.exp %29 : vector<2x64xf32>
      %cst_26 = arith.constant 1.000000e+00 : f32
      %31 = vector.broadcast %cst_26 : f32 to vector<2x64xf32>
      %32 = arith.addf %31, %30 : vector<2x64xf32>
      %33 = arith.divf %31, %32 : vector<2x64xf32>
      %c0_27 = arith.constant 0 : index
      %c0_28 = arith.constant 0 : index
      %34 = vector.load %arg5[%c0_27, %c0_28] : memref<2x64xf32, #tpu.memory_space<vmem>>, vector<2x64xf32>
      tpu.vector_store %arg5[%c0_27, %c0_28], %33 {strides = array<i32>} : memref<2x64xf32, #tpu.memory_space<vmem>>, vector<2x64xf32>,
    } else {
    }
    return
  }
  func.func @transform_0(%arg0: i32, %arg1: i32) -> (i32, i32, i32) {
    %c0_i32 = arith.constant 0 : i32
    %c0_i32_0 = arith.constant 0 : i32
    return %arg0, %c0_i32, %arg1 : i32, i32, i32
  }
  func.func @transform_1(%arg0: i32, %arg1: i32) -> (i32, i32) {
    %c0_i32 = arith.constant 0 : i32
    %c0_i32_0 = arith.constant 0 : i32
    %c0_i32_1 = arith.constant 0 : i32
    return %c0_i32, %c0_i32_0 : i32, i32
  }
  func.func @transform_2(%arg0: i32, %arg1: i32) -> (i32, i32) {
    %c0_i32 = arith.constant 0 : i32
    %c0_i32_0 = arith.constant 0 : i32
    %c0_i32_1 = arith.constant 0 : i32
    return %c0_i32, %c0_i32_0 : i32, i32
  }
  func.func @transform_3(%arg0: i32, %arg1: i32) -> (i32, i32) {
    %c0_i32 = arith.constant 0 : i32
    %c0_i32_0 = arith.constant 0 : i32
    return %arg0, %c0_i32 : i32, i32
  }
}

</mosaic_0001>

<llo_original>
// kernel: tpu_custom_call.1
$region0: #{tpu_custom_call.1}
  #allocation0 [shape = 'u32[]', space=smem, size = 0x4, offset = 0x4, fixed_abs, tag = 'smem constant byte address 0x4 - core index']
  #allocation1 [shape = 'u32[144,128]{1,0:T(1,128)}', space=vmem, size = 0x12000, scoped, tag = 'internal scratch']
  #allocation2 [shape = 'f32[2,64]{1,0:T(2,128)}', space=vmem, size = 0x400, scoped, tag = 'scratch operand']
  #allocation3 [shape = 'f32[2,64]{1,0:T(2,128)}', space=vmem, size = 0x400, scoped, tag = 'scratch operand']
  %s0 = inlined_call_operand.hbm [shape: f32[2,64,256], index: 0, kind: input, shape index: {}]
  %s1 = inlined_call_operand.hbm [shape: f32[4,64], index: 1, kind: input, shape index: {}]
  %s2 = inlined_call_operand.vmem [shape: f32[4,64], index: 2, kind: input, shape index: {}]
  %s3 = inlined_call_operand.hbm [shape: f32[2,64], index: 3, kind: output, shape index: {}]
  %s4 = sld [smem:[#allocation0]]
  $region38: #{tpu_custom_call.1} parent=0
    _
  %s6 = ssub.s32 1, %s4
  %s7 = scalar_select 0, %s6, %s4
  $region1: #{tpu_custom_call.1} parent=0
    #allocation4 [shape = 'u8[131072]{0}', space=vmem, size = 0x20000, scoped, tag = 'input window, operand 0, single buffered']
    #allocation5 [shape = 's32[1]{0}', space=sflag, size = 0x4, scoped, tag = 'scoped memory for tpu_custom_call.1']
    #allocation6 [shape = 's32[1]{0}', space=sflag, size = 0x4, scoped, tag = 'scoped memory for tpu_custom_call.1']
    #allocation7 [shape = 'u8[2048]{0}', space=vmem, size = 0x800, scoped, tag = 'input window, operand 1, single buffered']
    #allocation8 [shape = 's32[1]{0}', space=sflag, size = 0x4, scoped, tag = 'scoped memory for tpu_custom_call.1']
    #allocation9 [shape = 'u8[1024]{0}', space=vmem, size = 0x400, scoped, tag = 'output window, operand 0, single buffered']
    %8 = vsyncpa [#allocation5], 0
    %9 = vsyncpa [#allocation8], 0
    %10 = vsyncpa [#allocation6], 0
    // Predicated region
    $region2: #{tpu_custom_call.1} parent=1 // pred_check
      _
    $region3: #{tpu_custom_call.1} parent=1 // pred_check_branch
      %12 = sbr.rel (0) target = $region5
    $region4: #{tpu_custom_call.1} parent=1 // pred_region
      %s14 = ssub.s32 4096, 4096
      %15 = vsyncadd [#allocation5], %s14
      %s16 = sshll.u32 [#allocation4], 4
      %s17 = int_to_ptr.vmem [resolvable:$true] %s16
      %22 = dma.hbm_to_vmem [thread:$0]  %s0, 4096, %s17, [#allocation5], 256, 256, 16
    $region5: #{tpu_custom_call.1} parent=1 // pred_fallthru
      _
    // Predicated region
    $region6: #{tpu_custom_call.1} parent=1 // pred_check
      _
    $region7: #{tpu_custom_call.1} parent=1 // pred_check_branch
      %24 = sbr.rel (0) target = $region9
    $region8: #{tpu_custom_call.1} parent=1 // pred_region
      %s26 = ssub.s32 64, 64
      %27 = vsyncadd [#allocation8], %s26
      %s29 = sshll.u32 [#allocation7], 4
      %s30 = int_to_ptr.vmem [resolvable:$true] %s29
      %32 = dma.hbm_to_vmem [thread:$0]  %s1, 64, %s30, [#allocation8]
    $region9: #{tpu_custom_call.1} parent=1 // pred_fallthru
      _
    // Predicated region
    $region10: #{tpu_custom_call.1} parent=1 // pred_check
      _
    $region11: #{tpu_custom_call.1} parent=1 // pred_check_branch
      %34 = sbr.rel (0) target = $region13
    $region12: #{tpu_custom_call.1} parent=1 // pred_region
      _
    $region13: #{tpu_custom_call.1} parent=1 // pred_fallthru
      _
    // Predicated region
    $region14: #{tpu_custom_call.1} parent=1 // pred_check
      _
    $region15: #{tpu_custom_call.1} parent=1 // pred_check_branch
      %36 = sbr.rel (0) target = $region17
    $region16: #{tpu_custom_call.1} parent=1 // pred_region
      %37 = dma.done [#allocation5], 4096
    $region17: #{tpu_custom_call.1} parent=1 // pred_fallthru
      _
    // Predicated region
    $region18: #{tpu_custom_call.1} parent=1 // pred_check
      _
    $region19: #{tpu_custom_call.1} parent=1 // pred_check_branch
      %39 = sbr.rel (0) target = $region21
    $region20: #{tpu_custom_call.1} parent=1 // pred_region
      %40 = dma.done [#allocation8], 64
    $region21: #{tpu_custom_call.1} parent=1 // pred_fallthru
      _
    %p41 = scmp.eq.s32.totalorder 0, 0
    // Predicated region
    $region22: #{tpu_custom_call.1} parent=1 // pred_check
      %p42 = pneg %p41
    $region23: #{tpu_custom_call.1} parent=1 // pred_check_branch
      %44 = sbr.rel (%p42) target = $region25
    $region24: #{tpu_custom_call.1} parent=1 // pred_region
      %vm45 = vcmask 517120
      %46 = vst.msk [vmem:[#allocation2] sm:$0x3] %vm45, 0.0
      %47 = vst.msk [vmem:[#allocation3] sm:$0x3] %vm45, -inf
    $region25: #{tpu_custom_call.1} parent=1 // pred_fallthru
      _
    %v48 = vld [vmem:[#allocation4] sm:$0xff]
    %v49 = vld [vmem:[#allocation4 + $0x8] sm:$0xff]
    %v50 = vld [vmem:[#allocation4 + $0x10] sm:$0xff]
    %v51 = vld [vmem:[#allocation4 + $0x18] sm:$0xff]
    %v52 = vld [vmem:[#allocation4 + $0x20] sm:$0xff]
    %v53 = vld [vmem:[#allocation4 + $0x28] sm:$0xff]
    %v54 = vld [vmem:[#allocation4 + $0x30] sm:$0xff]
    %v55 = vld [vmem:[#allocation4 + $0x38] sm:$0xff]
    %v56 = vld [vmem:[#allocation4 + $0x40] sm:$0xff]
    %v57 = vld [vmem:[#allocation4 + $0x48] sm:$0xff]
    %v58 = vld [vmem:[#allocation4 + $0x50] sm:$0xff]
    %v59 = vld [vmem:[#allocation4 + $0x58] sm:$0xff]
    %v60 = vld [vmem:[#allocation4 + $0x60] sm:$0xff]
    %v61 = vld [vmem:[#allocation4 + $0x68] sm:$0xff]
    %v62 = vld [vmem:[#allocation4 + $0x70] sm:$0xff]
    %v63 = vld [vmem:[#allocation4 + $0x78] sm:$0xff]
    %v64 = vld [vmem:[#allocation4 + $0x80] sm:$0xff]
    %v65 = vld [vmem:[#allocation4 + $0x88] sm:$0xff]
    %v66 = vld [vmem:[#allocation4 + $0x90] sm:$0xff]
    %v67 = vld [vmem:[#allocation4 + $0x98] sm:$0xff]
    %v68 = vld [vmem:[#allocation4 + $0xa0] sm:$0xff]
    %v69 = vld [vmem:[#allocation4 + $0xa8] sm:$0xff]
    %v70 = vld [vmem:[#allocation4 + $0xb0] sm:$0xff]
    %v71 = vld [vmem:[#allocation4 + $0xb8] sm:$0xff]
    %v72 = vld [vmem:[#allocation4 + $0xc0] sm:$0xff]
    %v73 = vld [vmem:[#allocation4 + $0xc8] sm:$0xff]
    %v74 = vld [vmem:[#allocation4 + $0xd0] sm:$0xff]
    %v75 = vld [vmem:[#allocation4 + $0xd8] sm:$0xff]
    %v76 = vld [vmem:[#allocation4 + $0xe0] sm:$0xff]
    %v77 = vld [vmem:[#allocation4 + $0xe8] sm:$0xff]
    %v78 = vld [vmem:[#allocation4 + $0xf0] sm:$0xff]
    %v79 = vld [vmem:[#allocation4 + $0xf8] sm:$0xff]
    %v80 = vld [vmem:[#allocation2] sm:$0x3]
    %v81 = vadd.f32 %v48, %v49
    %82 = vadd.xlane.f32.xlu0 %v81
    %v83 = vpop.xlane.xlu0 %82
    %v84 = vadd.f32 %v50, %v51
    %85 = vadd.xlane.f32.xlu0 %v84
    %v86 = vpop.xlane.xlu0 %85
    %v87 = vadd.f32 %v52, %v53
    %88 = vadd.xlane.f32.xlu0 %v87
    %v89 = vpop.xlane.xlu0 %88
    %v90 = vadd.f32 %v54, %v55
    %91 = vadd.xlane.f32.xlu0 %v90
    %v92 = vpop.xlane.xlu0 %91
    %v93 = vadd.f32 %v56, %v57
    %94 = vadd.xlane.f32.xlu0 %v93
    %v95 = vpop.xlane.xlu0 %94
    %v96 = vadd.f32 %v58, %v59
    %97 = vadd.xlane.f32.xlu0 %v96
    %v98 = vpop.xlane.xlu0 %97
    %v99 = vadd.f32 %v60, %v61
    %100 = vadd.xlane.f32.xlu0 %v99
    %v101 = vpop.xlane.xlu0 %100
    %v102 = vadd.f32 %v62, %v63
    %103 = vadd.xlane.f32.xlu0 %v102
    %v104 = vpop.xlane.xlu0 %103
    %v105 = vadd.f32 %v64, %v65
    %106 = vadd.xlane.f32.xlu0 %v105
    %v107 = vpop.xlane.xlu0 %106
    %v108 = vadd.f32 %v66, %v67
    %109 = vadd.xlane.f32.xlu0 %v108
    %v110 = vpop.xlane.xlu0 %109
    %v111 = vadd.f32 %v68, %v69
    %112 = vadd.xlane.f32.xlu0 %v111
    %v113 = vpop.xlane.xlu0 %112
    %v114 = vadd.f32 %v70, %v71
    %115 = vadd.xlane.f32.xlu0 %v114
    %v116 = vpop.xlane.xlu0 %115
    %v117 = vadd.f32 %v72, %v73
    %118 = vadd.xlane.f32.xlu0 %v117
    %v119 = vpop.xlane.xlu0 %118
    %v120 = vadd.f32 %v74, %v75
    %121 = vadd.xlane.f32.xlu0 %v120
    %v122 = vpop.xlane.xlu0 %121
    %v123 = vadd.f32 %v76, %v77
    %124 = vadd.xlane.f32.xlu0 %v123
    %v125 = vpop.xlane.xlu0 %124
    %v126 = vadd.f32 %v78, %v79
    %127 = vadd.xlane.f32.xlu0 %v126
    %v128 = vpop.xlane.xlu0 %127
    %v145 = vlaneseq
    %v146 = vand.u32 %v145, 127
    %v147 = vlaneseq
    %v148 = vshrl.u32 %v147, 7
    %v149 = vsub.s32 %v146, %v148
    %v150 = vrot.slane %v83, %v149
    %v151 = vadd.s32 %v146, 4294967288
    %v152 = vlaneseq
    %v153 = vshrl.u32 %v152, 7
    %v154 = vsub.s32 %v151, %v153
    %v155 = vrot.slane %v86, %v154
    %vm156 = vcmask 130112
    %v157 = vsel %vm156, %v155, %v150
    %v158 = vadd.s32 %v146, 4294967280
    %v159 = vlaneseq
    %v160 = vshrl.u32 %v159, 7
    %v161 = vsub.s32 %v158, %v160
    %v162 = vrot.slane %v89, %v161
    %vm163 = vcmask 195712
    %v164 = vsel %vm163, %v162, %v157
    %v165 = vadd.s32 %v146, 4294967272
    %v166 = vlaneseq
    %v167 = vshrl.u32 %v166, 7
    %v168 = vsub.s32 %v165, %v167
    %v169 = vrot.slane %v92, %v168
    %vm170 = vcmask 261312
    %v171 = vsel %vm170, %v169, %v164
    %v172 = vadd.s32 %v146, 4294967264
    %v173 = vlaneseq
    %v174 = vshrl.u32 %v173, 7
    %v175 = vsub.s32 %v172, %v174
    %v176 = vrot.slane %v95, %v175
    %vm177 = vcmask 326912
    %v178 = vsel %vm177, %v176, %v171
    %v179 = vadd.s32 %v146, 4294967256
    %v180 = vlaneseq
    %v181 = vshrl.u32 %v180, 7
    %v182 = vsub.s32 %v179, %v181
    %v183 = vrot.slane %v98, %v182
    %vm184 = vcmask 392512
    %v185 = vsel %vm184, %v183, %v178
    %v186 = vadd.s32 %v146, 4294967248
    %v187 = vlaneseq
    %v188 = vshrl.u32 %v187, 7
    %v189 = vsub.s32 %v186, %v188
    %v190 = vrot.slane %v101, %v189
    %vm191 = vcmask 458112
    %v192 = vsel %vm191, %v190, %v185
    %v193 = vadd.s32 %v146, 4294967240
    %v194 = vlaneseq
    %v195 = vshrl.u32 %v194, 7
    %v196 = vsub.s32 %v193, %v195
    %v197 = vrot.slane %v104, %v196
    %vm198 = vcmask 523712
    %v199 = vsel %vm198, %v197, %v192
    %v200 = vlaneseq
    %v201 = vshrl.u32 %v200, 7
    %v202 = vsub.s32 %v146, %v201
    %v203 = vrot.slane %v107, %v202
    %v204 = vlaneseq
    %v205 = vshrl.u32 %v204, 7
    %v206 = vsub.s32 %v151, %v205
    %v207 = vrot.slane %v110, %v206
    %v208 = vsel %vm156, %v207, %v203
    %v209 = vlaneseq
    %v210 = vshrl.u32 %v209, 7
    %v211 = vsub.s32 %v158, %v210
    %v212 = vrot.slane %v113, %v211
    %v213 = vsel %vm163, %v212, %v208
    %v214 = vlaneseq
    %v215 = vshrl.u32 %v214, 7
    %v216 = vsub.s32 %v165, %v215
    %v217 = vrot.slane %v116, %v216
    %v218 = vsel %vm170, %v217, %v213
    %v219 = vlaneseq
    %v220 = vshrl.u32 %v219, 7
    %v221 = vsub.s32 %v172, %v220
    %v222 = vrot.slane %v119, %v221
    %v223 = vsel %vm177, %v222, %v218
    %v224 = vlaneseq
    %v225 = vshrl.u32 %v224, 7
    %v226 = vsub.s32 %v179, %v225
    %v227 = vrot.slane %v122, %v226
    %v228 = vsel %vm184, %v227, %v223
    %v229 = vlaneseq
    %v230 = vshrl.u32 %v229, 7
    %v231 = vsub.s32 %v186, %v230
    %v232 = vrot.slane %v125, %v231
    %v233 = vsel %vm191, %v232, %v228
    %v234 = vlaneseq
    %v235 = vshrl.u32 %v234, 7
    %v236 = vsub.s32 %v193, %v235
    %v237 = vrot.slane %v128, %v236
    %v238 = vsel %vm198, %v237, %v233
    %vm239 = vcmask 1041409
    %v240 = vsel %vm239, %v238, %v199
    %v242 = vadd.f32 %v80, %v240
    %vm243 = vcmask 517120
    %244 = vst.msk [vmem:[#allocation2] sm:$0x3] %vm243, %v242
    %v245 = vld [vmem:[#allocation3] sm:$0x3]
    %v246 = vmax.f32 %v48, %v49
    %247 = vmax.xlane.f32.xlu0 %v246
    %v248 = vpop.xlane.xlu0 %247
    %v249 = vmax.f32 %v50, %v51
    %250 = vmax.xlane.f32.xlu0 %v249
    %v251 = vpop.xlane.xlu0 %250
    %v252 = vmax.f32 %v52, %v53
    %253 = vmax.xlane.f32.xlu0 %v252
    %v254 = vpop.xlane.xlu0 %253
    %v255 = vmax.f32 %v54, %v55
    %256 = vmax.xlane.f32.xlu0 %v255
    %v257 = vpop.xlane.xlu0 %256
    %v258 = vmax.f32 %v56, %v57
    %259 = vmax.xlane.f32.xlu0 %v258
    %v260 = vpop.xlane.xlu0 %259
    %v261 = vmax.f32 %v58, %v59
    %262 = vmax.xlane.f32.xlu0 %v261
    %v263 = vpop.xlane.xlu0 %262
    %v264 = vmax.f32 %v60, %v61
    %265 = vmax.xlane.f32.xlu0 %v264
    %v266 = vpop.xlane.xlu0 %265
    %v267 = vmax.f32 %v62, %v63
    %268 = vmax.xlane.f32.xlu0 %v267
    %v269 = vpop.xlane.xlu0 %268
    %v270 = vmax.f32 %v64, %v65
    %271 = vmax.xlane.f32.xlu0 %v270
    %v272 = vpop.xlane.xlu0 %271
    %v273 = vmax.f32 %v66, %v67
    %274 = vmax.xlane.f32.xlu0 %v273
    %v275 = vpop.xlane.xlu0 %274
    %v276 = vmax.f32 %v68, %v69
    %277 = vmax.xlane.f32.xlu0 %v276
    %v278 = vpop.xlane.xlu0 %277
    %v279 = vmax.f32 %v70, %v71
    %280 = vmax.xlane.f32.xlu0 %v279
    %v281 = vpop.xlane.xlu0 %280
    %v282 = vmax.f32 %v72, %v73
    %283 = vmax.xlane.f32.xlu0 %v282
    %v284 = vpop.xlane.xlu0 %283
    %v285 = vmax.f32 %v74, %v75
    %286 = vmax.xlane.f32.xlu0 %v285
    %v287 = vpop.xlane.xlu0 %286
    %v288 = vmax.f32 %v76, %v77
    %289 = vmax.xlane.f32.xlu0 %v288
    %v290 = vpop.xlane.xlu0 %289
    %v291 = vmax.f32 %v78, %v79
    %292 = vmax.xlane.f32.xlu0 %v291
    %v293 = vpop.xlane.xlu0 %292
    %v310 = vlaneseq
    %v311 = vshrl.u32 %v310, 7
    %v312 = vsub.s32 %v146, %v311
    %v313 = vrot.slane %v248, %v312
    %v314 = vlaneseq
    %v315 = vshrl.u32 %v314, 7
    %v316 = vsub.s32 %v151, %v315
    %v317 = vrot.slane %v251, %v316
    %v318 = vsel %vm156, %v317, %v313
    %v319 = vlaneseq
    %v320 = vshrl.u32 %v319, 7
    %v321 = vsub.s32 %v158, %v320
    %v322 = vrot.slane %v254, %v321
    %v323 = vsel %vm163, %v322, %v318
    %v324 = vlaneseq
    %v325 = vshrl.u32 %v324, 7
    %v326 = vsub.s32 %v165, %v325
    %v327 = vrot.slane %v257, %v326
    %v328 = vsel %vm170, %v327, %v323
    %v329 = vlaneseq
    %v330 = vshrl.u32 %v329, 7
    %v331 = vsub.s32 %v172, %v330
    %v332 = vrot.slane %v260, %v331
    %v333 = vsel %vm177, %v332, %v328
    %v334 = vlaneseq
    %v335 = vshrl.u32 %v334, 7
    %v336 = vsub.s32 %v179, %v335
    %v337 = vrot.slane %v263, %v336
    %v338 = vsel %vm184, %v337, %v333
    %v339 = vlaneseq
    %v340 = vshrl.u32 %v339, 7
    %v341 = vsub.s32 %v186, %v340
    %v342 = vrot.slane %v266, %v341
    %v343 = vsel %vm191, %v342, %v338
    %v344 = vlaneseq
    %v345 = vshrl.u32 %v344, 7
    %v346 = vsub.s32 %v193, %v345
    %v347 = vrot.slane %v269, %v346
    %v348 = vsel %vm198, %v347, %v343
    %v349 = vlaneseq
    %v350 = vshrl.u32 %v349, 7
    %v351 = vsub.s32 %v146, %v350
    %v352 = vrot.slane %v272, %v351
    %v353 = vlaneseq
    %v354 = vshrl.u32 %v353, 7
    %v355 = vsub.s32 %v151, %v354
    %v356 = vrot.slane %v275, %v355
    %v357 = vsel %vm156, %v356, %v352
    %v358 = vlaneseq
    %v359 = vshrl.u32 %v358, 7
    %v360 = vsub.s32 %v158, %v359
    %v361 = vrot.slane %v278, %v360
    %v362 = vsel %vm163, %v361, %v357
    %v363 = vlaneseq
    %v364 = vshrl.u32 %v363, 7
    %v365 = vsub.s32 %v165, %v364
    %v366 = vrot.slane %v281, %v365
    %v367 = vsel %vm170, %v366, %v362
    %v368 = vlaneseq
    %v369 = vshrl.u32 %v368, 7
    %v370 = vsub.s32 %v172, %v369
    %v371 = vrot.slane %v284, %v370
    %v372 = vsel %vm177, %v371, %v367
    %v373 = vlaneseq
    %v374 = vshrl.u32 %v373, 7
    %v375 = vsub.s32 %v179, %v374
    %v376 = vrot.slane %v287, %v375
    %v377 = vsel %vm184, %v376, %v372
    %v378 = vlaneseq
    %v379 = vshrl.u32 %v378, 7
    %v380 = vsub.s32 %v186, %v379
    %v381 = vrot.slane %v290, %v380
    %v382 = vsel %vm191, %v381, %v377
    %v383 = vlaneseq
    %v384 = vshrl.u32 %v383, 7
    %v385 = vsub.s32 %v193, %v384
    %v386 = vrot.slane %v293, %v385
    %v387 = vsel %vm198, %v386, %v382
    %v388 = vsel %vm239, %v387, %v348
    %v390 = vmax.f32 %v245, %v388
    %391 = vst.msk [vmem:[#allocation3] sm:$0x3] %vm243, %v390
    // Predicated region
    $region26: #{tpu_custom_call.1} parent=1 // pred_check
      %p392 = pneg %p41
    $region27: #{tpu_custom_call.1} parent=1 // pred_check_branch
      %394 = sbr.rel (%p392) target = $region29
    $region28: #{tpu_custom_call.1} parent=1 // pred_region
      %v395 = vld [vmem:[#allocation2] sm:$0x3]
      %v396 = vmul.f32 %v395, 0.00390625
      %v397 = vld [vmem:[#allocation3] sm:$0x3]
      %v399 = vrot.slane %v397, 6
      %vm401 = vcmask 1041408
      %v402 = vsel %vm401, %v396, %v399
      %v403 = vld [vmem:[#allocation7] sm:$0xf]
      %v404 = vld [vmem:[%s2] sm:$0xf]
      %vm405 = vcmask 523264
      %v407 = vsel %vm405, %v402, 0
      %v410 = vsel %vm405, %v403, 0
      %412 = vmatprep.subr.mxu0 0.0
      %413 = vmatpush1.xpose.msra.mxu0 %v410
      %414 = vmatprep.subr.mxu0 0.0
      %415 = vmatpush1.xpose.msra.mxu0 0.0
      %416 = vmatprep.subr.mxu0 0.0
      %417 = vmatpush1.xpose.msra.mxu0 0.0
      %418 = vmatprep.subr.mxu0 0.0
      %419 = vmatpush1.xpose.msra.mxu0 0.0
      %420 = vmatprep.subr.mxu0 0.0
      %421 = vmatpush1.xpose.msra.mxu0 0.0
      %422 = vmatprep.subr.mxu0 0.0
      %423 = vmatpush1.xpose.msra.mxu0 0.0
      %424 = vmatprep.subr.mxu0 0.0
      %425 = vmatpush1.xpose.msra.mxu0 0.0
      %426 = vmatprep.subr.mxu0 0.0
      %427 = vmatpush1.xpose.msra.mxu0 0.0
      %428 = vmatprep.subr.mxu0 0.0
      %429 = vmatpush1.xpose.msra.mxu0 0.0
      %430 = vmatprep.subr.mxu0 0.0
      %431 = vmatpush1.xpose.msra.mxu0 0.0
      %432 = vmatprep.subr.mxu0 0.0
      %433 = vmatpush1.xpose.msra.mxu0 0.0
      %434 = vmatprep.subr.mxu0 0.0
      %435 = vmatpush1.xpose.msra.mxu0 0.0
      %436 = vmatprep.subr.mxu0 0.0
      %437 = vmatpush1.xpose.msra.mxu0 0.0
      %438 = vmatprep.subr.mxu0 0.0
      %439 = vmatpush1.xpose.msra.mxu0 0.0
      %440 = vmatprep.subr.mxu0 0.0
      %441 = vmatpush1.xpose.msra.mxu0 0.0
      %442 = vmatprep.subr.mxu0 0.0
      %443 = vmatpush1.xpose.msra.mxu0 0.0
      %444 = vmatprep.subr.mxu0 0.0
      %445 = vmatpush1.xpose.msra.mxu0 0.0
      %446 = vmatprep.subr.mxu0 0.0
      %447 = vmatpush1.xpose.msra.mxu0 0.0
      %448 = vmatprep.subr.mxu0 0.0
      %449 = vmatpush1.xpose.msra.mxu0 0.0
      %450 = vmatprep.subr.mxu0 0.0
      %451 = vmatpush1.xpose.msra.mxu0 0.0
      %452 = vmatprep.subr.mxu0 0.0
      %453 = vmatpush1.xpose.msra.mxu0 0.0
      %454 = vmatprep.subr.mxu0 0.0
      %455 = vmatpush1.xpose.msra.mxu0 0.0
      %456 = vmatprep.subr.mxu0 0.0
      %457 = vmatpush1.xpose.msra.mxu0 0.0
      %458 = vmatprep.subr.mxu0 0.0
      %459 = vmatpush1.xpose.msra.mxu0 0.0
      %460 = vmatprep.subr.mxu0 0.0
      %461 = vmatpush1.xpose.msra.mxu0 0.0
      %462 = vmatprep.subr.mxu0 0.0
      %463 = vmatpush1.xpose.msra.mxu0 0.0
      %464 = vmatprep.subr.mxu0 0.0
      %465 = vmatpush1.xpose.msra.mxu0 0.0
      %466 = vmatprep.subr.mxu0 0.0
      %467 = vmatpush1.xpose.msra.mxu0 0.0
      %468 = vmatprep.subr.mxu0 0.0
      %469 = vmatpush1.xpose.msra.mxu0 0.0
      %470 = vmatprep.subr.mxu0 0.0
      %471 = vmatpush1.xpose.msra.mxu0 0.0
      %472 = vmatprep.subr.mxu0 0.0
      %473 = vmatpush1.xpose.msra.mxu0 0.0
      %474 = vmatprep.subr.mxu0 0.0
      %475 = vmatpush1.xpose.msra.mxu0 0.0
      %476 = vmatprep.mubr.f32.mxu0 0.0
      %477 = vmatmul.mubr.f32.gmra.mrb[0].mxu0 %v407
      %v478 = vpop.f32.mrb[0].mxu0
      %v479 = vadd.f32 0.0, %v478
      %v480 = vpop.f32.mrb[0].mxu0
      %481 = vdwg.mxu0
      %v482 = vmax.f32 %v479, 0.0
      %vm483 = vcmask 31744
      %v485 = vsel %vm483, %v482, 0
      %vm487 = vcmask 1043456
      %v489 = vsel %vm487, %v404, 0
      %491 = vmatprep.subr.mxu0 0.0
      %492 = vmatpush1.msra.mxu0 %v489
      %493 = vmatprep.subr.mxu0 0.0
      %494 = vmatpush1.msra.mxu0 0.0
      %495 = vmatprep.subr.mxu0 0.0
      %496 = vmatpush1.msra.mxu0 0.0
      %497 = vmatprep.subr.mxu0 0.0
      %498 = vmatpush1.msra.mxu0 0.0
      %499 = vmatprep.subr.mxu0 0.0
      %500 = vmatpush1.msra.mxu0 0.0
      %501 = vmatprep.subr.mxu0 0.0
      %502 = vmatpush1.msra.mxu0 0.0
      %503 = vmatprep.subr.mxu0 0.0
      %504 = vmatpush1.msra.mxu0 0.0
      %505 = vmatprep.subr.mxu0 0.0
      %506 = vmatpush1.msra.mxu0 0.0
      %507 = vmatprep.subr.mxu0 0.0
      %508 = vmatpush1.msra.mxu0 0.0
      %509 = vmatprep.subr.mxu0 0.0
      %510 = vmatpush1.msra.mxu0 0.0
      %511 = vmatprep.subr.mxu0 0.0
      %512 = vmatpush1.msra.mxu0 0.0
      %513 = vmatprep.subr.mxu0 0.0
      %514 = vmatpush1.msra.mxu0 0.0
      %515 = vmatprep.subr.mxu0 0.0
      %516 = vmatpush1.msra.mxu0 0.0
      %517 = vmatprep.subr.mxu0 0.0
      %518 = vmatpush1.msra.mxu0 0.0
      %519 = vmatprep.subr.mxu0 0.0
      %520 = vmatpush1.msra.mxu0 0.0
      %521 = vmatprep.subr.mxu0 0.0
      %522 = vmatpush1.msra.mxu0 0.0
      %523 = vmatprep.subr.mxu0 0.0
      %524 = vmatpush1.msra.mxu0 0.0
      %525 = vmatprep.subr.mxu0 0.0
      %526 = vmatpush1.msra.mxu0 0.0
      %527 = vmatprep.subr.mxu0 0.0
      %528 = vmatpush1.msra.mxu0 0.0
      %529 = vmatprep.subr.mxu0 0.0
      %530 = vmatpush1.msra.mxu0 0.0
      %531 = vmatprep.subr.mxu0 0.0
      %532 = vmatpush1.msra.mxu0 0.0
      %533 = vmatprep.subr.mxu0 0.0
      %534 = vmatpush1.msra.mxu0 0.0
      %535 = vmatprep.subr.mxu0 0.0
      %536 = vmatpush1.msra.mxu0 0.0
      %537 = vmatprep.subr.mxu0 0.0
      %538 = vmatpush1.msra.mxu0 0.0
      %539 = vmatprep.subr.mxu0 0.0
      %540 = vmatpush1.msra.mxu0 0.0
      %541 = vmatprep.subr.mxu0 0.0
      %542 = vmatpush1.msra.mxu0 0.0
      %543 = vmatprep.subr.mxu0 0.0
      %544 = vmatpush1.msra.mxu0 0.0
      %545 = vmatprep.subr.mxu0 0.0
      %546 = vmatpush1.msra.mxu0 0.0
      %547 = vmatprep.subr.mxu0 0.0
      %548 = vmatpush1.msra.mxu0 0.0
      %549 = vmatprep.subr.mxu0 0.0
      %550 = vmatpush1.msra.mxu0 0.0
      %551 = vmatprep.subr.mxu0 0.0
      %552 = vmatpush1.msra.mxu0 0.0
      %553 = vmatprep.subr.mxu0 0.0
      %554 = vmatpush1.msra.mxu0 0.0
      %555 = vmatprep.mubr.f32.mxu0 0.0
      %556 = vmatmul.mubr.f32.gmra.mrb[0].mxu0 %v485
      %v557 = vpop.f32.mrb[0].mxu0
      %v558 = vadd.f32 0.0, %v557
      %v559 = vpop.f32.mrb[0].mxu0
      %560 = vdwg.mxu0
      %v562 = vrot.slane %v558, 2
      %v564 = vadd.f32 %v558, %v562
      %v565 = vxor.u32 %v564, 2147483648
      %v566 = vmul.f32 %v565, 1.442695
      %v567 = vpow.pop %v566
      %v568 = vadd.f32 %v567, 1.0
      %v569 = vrcp.pop %v568
      %v570 = vmul.f32 1.0, %v569
      %571 = vst.msk [vmem:[#allocation9] sm:$0x3] %vm243, %v570
    $region29: #{tpu_custom_call.1} parent=1 // pred_fallthru
      _
    // Predicated region
    $region30: #{tpu_custom_call.1} parent=1 // pred_check
      _
    $region31: #{tpu_custom_call.1} parent=1 // pred_check_branch
      %573 = sbr.rel (0) target = $region33
    $region32: #{tpu_custom_call.1} parent=1 // pred_region
      %s575 = ssub.s32 32, 32
      %576 = vsyncadd [#allocation6], %s575
      %s578 = sshll.u32 [#allocation9], 4
      %s579 = int_to_ptr.vmem [resolvable:$true] %s578
      %581 = dma.vmem_to_hbm [thread:$0]  %s579, 32, %s3, [#allocation6]
    $region33: #{tpu_custom_call.1} parent=1 // pred_fallthru
      _
    // Predicated region
    $region34: #{tpu_custom_call.1} parent=1 // pred_check
      _
    $region35: #{tpu_custom_call.1} parent=1 // pred_check_branch
      %583 = sbr.rel (0) target = $region37
    $region36: #{tpu_custom_call.1} parent=1 // pred_region
      %584 = dma.done [#allocation6], 32
    $region37: #{tpu_custom_call.1} parent=1 // pred_fallthru
      _
    %585 = vsyncpa [#allocation5], 1
    %586 = vsyncpa [#allocation8], 1
    %587 = vsyncpa [#allocation6], 1

</llo_original>
